<compile_context>
chip_gen: v7x
topology: tpu7x:2x2x1
jax: 0.10.0
libtpu: 0.0.40
codegen_flags: <defaults>
</compile_context>

<pallas_src>
import functools

import numpy as np
import jax
import jax.numpy as jnp
from jax.experimental import pallas as pl
from jax.experimental.pallas import tpu as pltpu


# ----------------------------------------------------------------------------
# Glue: PyTorch-exact bicubic interpolation matrices (align_corners=False).
# ----------------------------------------------------------------------------
def _cubic1(x, A):
    return ((A + 2.0) * x - (A + 3.0)) * x * x + 1.0


def _cubic2(x, A):
    return ((A * x - 5.0 * A) * x + 8.0 * A) * x - 4.0 * A


def bicubic_matrix(in_size, out_size, A=-0.75):
    """M so that (M @ v) == F.interpolate(v, out_size, mode='bicubic') on one axis."""
    M = np.zeros((out_size, in_size), dtype=np.float32)
    scale = in_size / out_size
    for i in range(out_size):
        src = (i + 0.5) * scale - 0.5
        x0 = int(np.floor(src))
        t = src - x0
        coeffs = (_cubic2(t + 1.0, A), _cubic1(t, A),
                  _cubic1(1.0 - t, A), _cubic2(2.0 - t, A))
        for k in range(4):
            idx = min(max(x0 - 1 + k, 0), in_size - 1)   # border replicate, as PyTorch
            M[i, idx] += coeffs[k]
    return M


def _row_tile(h, max_rows=64):
    """Largest row-tile that is a multiple of 8 (or the full extent) and divides H."""
    if h <= max_rows:
        return h
    best = None
    for th in range(8, max_rows + 1, 8):
        if h % th == 0:
            best = th
    return best if best is not None else h


# ----------------------------------------------------------------------------
# Pallas kernel: one (batch, row-tile) per grid step.
# ----------------------------------------------------------------------------
def _cp_beta_noise_kernel(ab_ref, wh_ref, wwT_ref, nrm_ref, unf_ref, out_ref,
                          *, n_rounds):
    wh = wh_ref[...]           # (TH, CH)
    wwT = wwT_ref[...]         # (CW, W)
    a_cp = ab_ref[0, 0]        # (CH, CW)
    b_cp = ab_ref[0, 1]        # (CH, CW)

    # Bicubic upsample of the control grids as two small matmuls per tile.
    A = jnp.dot(jnp.dot(wh, a_cp, preferred_element_type=jnp.float32), wwT,
                preferred_element_type=jnp.float32)          # (TH, W)
    Bm = jnp.dot(jnp.dot(wh, b_cp, preferred_element_type=jnp.float32), wwT,
                 preferred_element_type=jnp.float32)          # (TH, W)

    # clamp(min=0.001); stack so both Gamma draws share one loop nest.
    alpha = jnp.maximum(jnp.stack([A, Bm], axis=0), 0.001)    # (2, TH, W)

    # Marsaglia-Tsang Gamma(alpha, 1) with the alpha < 1 boost.
    boost_needed = alpha < 1.0
    a = jnp.where(boost_needed, alpha + 1.0, alpha)
    d = a - (1.0 / 3.0)
    c = jax.lax.rsqrt(9.0 * d)

    def body(i, carry):
        g, acc = carry
        x = nrm_ref[0, :, i]                                  # (2, TH, W) normals
        u = unf_ref[0, :, i]                                  # (2, TH, W) uniforms
        v = 1.0 + c * x
        v = v * v * v
        logv = jnp.log(jnp.maximum(v, 1e-30))
        ok = (v > 0.0) & (jnp.log(u) < 0.5 * x * x + d * (1.0 - v + logv))
        take = ok & (acc < 0.5)
        g = jnp.where(take, d * v, g)
        acc = jnp.maximum(acc, ok.astype(jnp.float32))
        return g, acc

    # Fallback g = d if every round rejects (prob < 1e-5 with 4 rounds).
    g0 = d
    acc0 = jnp.zeros(alpha.shape, dtype=jnp.float32)
    g, _ = jax.lax.fori_loop(0, n_rounds, body, (g0, acc0))

    # Boost for alpha < 1:  g *= u^(1/alpha)   (computed everywhere, selected).
    u2 = unf_ref[0, :, n_rounds]
    g = jnp.where(boost_needed, g * jnp.exp(jnp.log(u2) / alpha), g)
    g = jnp.maximum(g, 1e-30)

    ga = g[0]
    gb = g[1]
    n = ga / (ga + gb)                                        # Beta(A, B) sample
    out_ref[0, 0, :, :] = n.astype(out_ref.dtype)


# ----------------------------------------------------------------------------
# Wrapper.
# ----------------------------------------------------------------------------
def control_point_beta_noise(x, alpha_unbound, beta_unbound, seed, n_rounds=4):
    """Forward pass of ControlPointBetaNoise.  Output: (B, 1, H, W) f32."""
    Bn, _, ch, cw = alpha_unbound.shape
    H, W = x.shape[-2], x.shape[-1]

    TH = _row_tile(H)
    n_row_tiles = H // TH

    wh = jnp.asarray(bicubic_matrix(ch, H))                   # (H, ch)
    wwT = jnp.asarray(bicubic_matrix(cw, W)).T                # (cw, W)
    ab_cp = jnp.concatenate([alpha_unbound, beta_unbound],
                            axis=1).astype(jnp.float32)       # (B, 2, ch, cw)

    # Raw randomness (parameter-free) drawn outside the kernel; the kernel does
    # all of the distribution shaping.  Same distribution as torch's rsample,
    # different bitstream.
    key = jax.random.PRNGKey(seed)
    kn, ku = jax.random.split(key)
    normals = jax.random.normal(kn, (Bn, 2, n_rounds, H, W), dtype=jnp.float32)
    unifs = jax.random.uniform(ku, (Bn, 2, n_rounds + 1, H, W),
                               dtype=jnp.float32, minval=1e-12, maxval=1.0)

    kernel = functools.partial(_cp_beta_noise_kernel, n_rounds=n_rounds)

    return pl.pallas_call(
        kernel,
        out_shape=jax.ShapeDtypeStruct((Bn, 1, H, W), jnp.float32),
        grid=(Bn, n_row_tiles),
        in_specs=[
            pl.BlockSpec((1, 2, ch, cw), lambda b, r: (b, 0, 0, 0)),
            pl.BlockSpec((TH, ch), lambda b, r: (r, 0)),
            pl.BlockSpec((cw, W), lambda b, r: (0, 0)),
            pl.BlockSpec((1, 2, n_rounds, TH, W), lambda b, r: (b, 0, 0, r, 0)),
            pl.BlockSpec((1, 2, n_rounds + 1, TH, W), lambda b, r: (b, 0, 0, r, 0)),
        ],
        out_specs=pl.BlockSpec((1, 1, TH, W), lambda b, r: (b, 0, r, 0)),
        compiler_params=pltpu.CompilerParams(
            dimension_semantics=("parallel", "parallel")),
    )(ab_cp, wh, wwT, normals, unifs)


if __name__ == "__main__":
    key = jax.random.PRNGKey(0)
    k1, k2, k3 = jax.random.split(key, 3)

    B, C, H, W = 2, 4, 16, 16
    cp_shape = (B, 1, 9, 9)

    # reset_params(): params = 10 ** (Beta(2,2).sample() * 2 - 1)
    alpha_unbound = 10.0 ** (jax.random.beta(k1, 2.0, 2.0, cp_shape) * 2.0 - 1.0)
    beta_unbound = 10.0 ** (jax.random.beta(k2, 2.0, 2.0, cp_shape) * 2.0 - 1.0)
    alpha_unbound = alpha_unbound.astype(jnp.float32)
    beta_unbound = beta_unbound.astype(jnp.float32)

    x = jax.random.normal(k3, (B, C, H, W), dtype=jnp.float32)

    out = control_point_beta_noise(x, alpha_unbound, beta_unbound, seed=1234)
    out = jax.block_until_ready(out)

    assert out.shape == (B, 1, H, W), out.shape
    assert out.dtype == jnp.float32
    o = np.asarray(out)
    assert np.all(np.isfinite(o))
    assert np.all(o >= 0.0) and np.all(o <= 1.0)

    print("KERNEL_OK")
</pallas_src>

<mosaic_0001>
module attributes {stable_mosaic.version = 11 : i64} {
  func.func @_cp_beta_noise_kernel(%arg0: i32, %arg1: i32, %arg2: memref<1x2x9x9xf32, #tpu.memory_space<vmem>>, %arg3: memref<16x9xf32, #tpu.memory_space<vmem>>, %arg4: memref<9x16xf32, #tpu.memory_space<vmem>>, %arg5: memref<1x2x4x16x16xf32, #tpu.memory_space<vmem>>, %arg6: memref<1x2x5x16x16xf32, #tpu.memory_space<vmem>>, %arg7: memref<1x1x16x16xf32, #tpu.memory_space<vmem>>) attributes {dimension_semantics = [#tpu.dimension_semantics<parallel>, #tpu.dimension_semantics<parallel>], iteration_bounds = array<i64: 2, 1>, scalar_prefetch = 0 : i64, scratch_operands = 0 : i64, tpu.core_type = #tpu.core_type<tc>, window_params = [{transform_indices = @transform_0, window_bounds = array<i64: 1, 2, 9, 9>}, {transform_indices = @transform_1, window_bounds = array<i64: 16, 9>}, {pipeline_mode = #tpu.pipeline_mode<synchronous>, transform_indices = @transform_2, window_bounds = array<i64: 9, 16>}, {transform_indices = @transform_3, window_bounds = array<i64: 1, 2, 4, 16, 16>}, {transform_indices = @transform_4, window_bounds = array<i64: 1, 2, 5, 16, 16>}, {transform_indices = @transform_5, window_bounds = array<i64: 1, 1, 16, 16>}]} {
    %c0 = arith.constant 0 : index
    %c0_0 = arith.constant 0 : index
    %0 = vector.load %arg3[%c0, %c0_0] : memref<16x9xf32, #tpu.memory_space<vmem>>, vector<16x9xf32>
    %c0_1 = arith.constant 0 : index
    %c0_2 = arith.constant 0 : index
    %1 = vector.load %arg4[%c0_1, %c0_2] : memref<9x16xf32, #tpu.memory_space<vmem>>, vector<9x16xf32>
    %c0_3 = arith.constant 0 : index
    %c0_4 = arith.constant 0 : index
    %c0_5 = arith.constant 0 : index
    %c0_6 = arith.constant 0 : index
    %2 = vector.load %arg2[%c0_3, %c0_4, %c0_5, %c0_6] : memref<1x2x9x9xf32, #tpu.memory_space<vmem>>, vector<1x1x9x9xf32>
    %3 = vector.shape_cast %2 : vector<1x1x9x9xf32> to vector<9x9xf32>
    %c0_7 = arith.constant 0 : index
    %c1 = arith.constant 1 : index
    %c0_8 = arith.constant 0 : index
    %c0_9 = arith.constant 0 : index
    %4 = vector.load %arg2[%c0_7, %c1, %c0_8, %c0_9] : memref<1x2x9x9xf32, #tpu.memory_space<vmem>>, vector<1x1x9x9xf32>
    %5 = vector.shape_cast %4 : vector<1x1x9x9xf32> to vector<9x9xf32>
    %cst = arith.constant dense<0.000000e+00> : vector<16x9xf32>
    %6 = tpu.matmul %0, %3, %cst {dimension_numbers = #tpu.dot_dimension_numbers<[1], [0], [0], [1], [0, 0, 1, 1], [], []>} : vector<16x9xf32>, vector<9x9xf32>, vector<16x9xf32> -> vector<16x9xf32>
    %cst_10 = arith.constant dense<0.000000e+00> : vector<16x16xf32>
    %7 = tpu.matmul %6, %1, %cst_10 {dimension_numbers = #tpu.dot_dimension_numbers<[1], [0], [0], [1], [0, 0, 1, 1], [], []>} : vector<16x9xf32>, vector<9x16xf32>, vector<16x16xf32> -> vector<16x16xf32>
    %cst_11 = arith.constant dense<0.000000e+00> : vector<16x9xf32>
    %8 = tpu.matmul %0, %5, %cst_11 {dimension_numbers = #tpu.dot_dimension_numbers<[1], [0], [0], [1], [0, 0, 1, 1], [], []>} : vector<16x9xf32>, vector<9x9xf32>, vector<16x9xf32> -> vector<16x9xf32>
    %cst_12 = arith.constant dense<0.000000e+00> : vector<16x16xf32>
    %9 = tpu.matmul %8, %1, %cst_12 {dimension_numbers = #tpu.dot_dimension_numbers<[1], [0], [0], [1], [0, 0, 1, 1], [], []>} : vector<16x9xf32>, vector<9x16xf32>, vector<16x16xf32> -> vector<16x16xf32>
    %10 = vector.shape_cast %7 : vector<16x16xf32> to vector<1x16x16xf32>
    %11 = vector.shape_cast %9 : vector<16x16xf32> to vector<1x16x16xf32>
    %12 = tpu.concatenate %10, %11 in 0 : vector<1x16x16xf32>, vector<1x16x16xf32> -> vector<2x16x16xf32>
    %cst_13 = arith.constant 1.000000e-03 : f32
    %13 = vector.broadcast %cst_13 : f32 to vector<2x16x16xf32>
    %14 = arith.maximumf %12, %13 : vector<2x16x16xf32>
    %cst_14 = arith.constant 1.000000e+00 : f32
    %15 = vector.broadcast %cst_14 : f32 to vector<2x16x16xf32>
    %16 = arith.cmpf olt, %14, %15 : vector<2x16x16xf32>
    %cst_15 = arith.constant 1.000000e+00 : f32
    %17 = vector.broadcast %cst_15 : f32 to vector<2x16x16xf32>
    %18 = arith.addf %14, %17 : vector<2x16x16xf32>
    %19 = arith.select %16, %18, %14 : vector<2x16x16xi1>, vector<2x16x16xf32>
    %cst_16 = arith.constant 0.333333343 : f32
    %20 = vector.broadcast %cst_16 : f32 to vector<2x16x16xf32>
    %21 = arith.subf %19, %20 : vector<2x16x16xf32>
    %cst_17 = arith.constant 9.000000e+00 : f32
    %22 = vector.broadcast %cst_17 : f32 to vector<2x16x16xf32>
    %23 = arith.mulf %22, %21 : vector<2x16x16xf32>
    %24 = math.rsqrt %23 : vector<2x16x16xf32>
    %cst_18 = arith.constant 0.000000e+00 : f32
    %25 = vector.broadcast %cst_18 : f32 to vector<2x16x16xf32>
    %c0_i32 = arith.constant 0 : i32
    %c4_i32 = arith.constant 4 : i32
    %26 = arith.addi %c0_i32, %c4_i32 : i32
    %c1_i32 = arith.constant 1 : i32
    %27:2 = scf.for %arg8 = %c0_i32 to %26 step %c1_i32 iter_args(%arg9 = %21, %arg10 = %25) -> (vector<2x16x16xf32>, vector<2x16x16xf32>)  : i32 {
      %c0_29 = arith.constant 0 : index
      %c0_30 = arith.constant 0 : index
      %46 = arith.index_cast %arg8 : i32 to index
      %c0_31 = arith.constant 0 : index
      %c0_32 = arith.constant 0 : index
      %47 = vector.load %arg5[%c0_29, %c0_30, %46, %c0_31, %c0_32] : memref<1x2x4x16x16xf32, #tpu.memory_space<vmem>>, vector<1x2x1x16x16xf32>
      %48 = vector.shape_cast %47 : vector<1x2x1x16x16xf32> to vector<2x16x16xf32>
      %c0_33 = arith.constant 0 : index
      %c0_34 = arith.constant 0 : index
      %49 = arith.index_cast %arg8 : i32 to index
      %c0_35 = arith.constant 0 : index
      %c0_36 = arith.constant 0 : index
      %50 = vector.load %arg6[%c0_33, %c0_34, %49, %c0_35, %c0_36] : memref<1x2x5x16x16xf32, #tpu.memory_space<vmem>>, vector<1x2x1x16x16xf32>
      %51 = vector.shape_cast %50 : vector<1x2x1x16x16xf32> to vector<2x16x16xf32>
      %52 = arith.mulf %24, %48 : vector<2x16x16xf32>
      %cst_37 = arith.constant 1.000000e+00 : f32
      %53 = vector.broadcast %cst_37 : f32 to vector<2x16x16xf32>
      %54 = arith.addf %53, %52 : vector<2x16x16xf32>
      %55 = arith.mulf %54, %54 : vector<2x16x16xf32>
      %56 = arith.mulf %55, %54 : vector<2x16x16xf32>
      %cst_38 = arith.constant 1.000000e-30 : f32
      %57 = vector.broadcast %cst_38 : f32 to vector<2x16x16xf32>
      %58 = arith.maximumf %56, %57 : vector<2x16x16xf32>
      %59 = math.log %58 : vector<2x16x16xf32>
      %cst_39 = arith.constant 0.000000e+00 : f32
      %60 = vector.broadcast %cst_39 : f32 to vector<2x16x16xf32>
      %61 = arith.cmpf ogt, %56, %60 : vector<2x16x16xf32>
      %62 = math.log %51 : vector<2x16x16xf32>
      %cst_40 = arith.constant 5.000000e-01 : f32
      %63 = vector.broadcast %cst_40 : f32 to vector<2x16x16xf32>
      %64 = arith.mulf %63, %48 : vector<2x16x16xf32>
      %65 = arith.mulf %64, %48 : vector<2x16x16xf32>
      %cst_41 = arith.constant 1.000000e+00 : f32
      %66 = vector.broadcast %cst_41 : f32 to vector<2x16x16xf32>
      %67 = arith.subf %66, %56 : vector<2x16x16xf32>
      %68 = arith.addf %67, %59 : vector<2x16x16xf32>
      %69 = arith.mulf %21, %68 : vector<2x16x16xf32>
      %70 = arith.addf %65, %69 : vector<2x16x16xf32>
      %71 = arith.cmpf olt, %62, %70 : vector<2x16x16xf32>
      %72 = arith.andi %61, %71 : vector<2x16x16xi1>
      %cst_42 = arith.constant 5.000000e-01 : f32
      %73 = vector.broadcast %cst_42 : f32 to vector<2x16x16xf32>
      %74 = arith.cmpf olt, %arg10, %73 : vector<2x16x16xf32>
      %75 = arith.andi %72, %74 : vector<2x16x16xi1>
      %76 = arith.mulf %21, %56 : vector<2x16x16xf32>
      %77 = arith.select %75, %76, %arg9 : vector<2x16x16xi1>, vector<2x16x16xf32>
      %78 = arith.extui %72 : vector<2x16x16xi1> to vector<2x16x16xi32>
      %79 = arith.sitofp %78 : vector<2x16x16xi32> to vector<2x16x16xf32>
      %80 = arith.maximumf %arg10, %79 : vector<2x16x16xf32>
      scf.yield %77, %80 : vector<2x16x16xf32>, vector<2x16x16xf32>
    }
    %c4_i32_19 = arith.constant 4 : i32
    %c0_20 = arith.constant 0 : index
    %c0_21 = arith.constant 0 : index
    %c4 = arith.constant 4 : index
    %c0_22 = arith.constant 0 : index
    %c0_23 = arith.constant 0 : index
    %28 = vector.load %arg6[%c0_20, %c0_21, %c4, %c0_22, %c0_23] : memref<1x2x5x16x16xf32, #tpu.memory_space<vmem>>, vector<1x2x1x16x16xf32>
    %29 = vector.shape_cast %28 : vector<1x2x1x16x16xf32> to vector<2x16x16xf32>
    %30 = math.log %29 : vector<2x16x16xf32>
    %31 = arith.divf %30, %14 : vector<2x16x16xf32>
    %32 = math.exp %31 : vector<2x16x16xf32>
    %33 = arith.mulf %27#0, %32 : vector<2x16x16xf32>
    %34 = arith.select %16, %33, %27#0 : vector<2x16x16xi1>, vector<2x16x16xf32>
    %cst_24 = arith.constant 1.000000e-30 : f32
    %35 = vector.broadcast %cst_24 : f32 to vector<2x16x16xf32>
    %36 = arith.maximumf %34, %35 : vector<2x16x16xf32>
    %37 = vector.extract_strided_slice %36 {offsets = [0, 0, 0], sizes = [1, 16, 16], strides = [1, 1, 1]} : vector<2x16x16xf32> to vector<1x16x16xf32>
    %38 = vector.shape_cast %37 : vector<1x16x16xf32> to vector<16x16xf32>
    %39 = vector.extract_strided_slice %36 {offsets = [1, 0, 0], sizes = [1, 16, 16], strides = [1, 1, 1]} : vector<2x16x16xf32> to vector<1x16x16xf32>
    %40 = vector.shape_cast %39 : vector<1x16x16xf32> to vector<16x16xf32>
    %41 = arith.addf %38, %40 : vector<16x16xf32>
    %42 = arith.divf %38, %41 : vector<16x16xf32>
    %c0_25 = arith.constant 0 : index
    %c0_26 = arith.constant 0 : index
    %c0_27 = arith.constant 0 : index
    %c0_28 = arith.constant 0 : index
    %43 = vector.load %arg7[%c0_25, %c0_26, %c0_27, %c0_28] : memref<1x1x16x16xf32, #tpu.memory_space<vmem>>, vector<1x1x16x16xf32>
    %44 = vector.shape_cast %43 : vector<1x1x16x16xf32> to vector<16x16xf32>
    %45 = vector.shape_cast %42 : vector<16x16xf32> to vector<1x1x16x16xf32>
    tpu.vector_store %arg7[%c0_25, %c0_26, %c0_27, %c0_28], %45 {strides = array<i32>} : memref<1x1x16x16xf32, #tpu.memory_space<vmem>>, vector<1x1x16x16xf32>,
    return
  }
  func.func @transform_0(%arg0: i32, %arg1: i32) -> (i32, i32, i32, i32) {
    %c0_i32 = arith.constant 0 : i32
    %c0_i32_0 = arith.constant 0 : i32
    %c0_i32_1 = arith.constant 0 : i32
    %c0_i32_2 = arith.constant 0 : i32
    return %arg0, %c0_i32, %c0_i32_0, %c0_i32_1 : i32, i32, i32, i32
  }
  func.func @transform_1(%arg0: i32, %arg1: i32) -> (i32, i32) {
    %c0_i32 = arith.constant 0 : i32
    %c0_i32_0 = arith.constant 0 : i32
    return %arg1, %c0_i32 : i32, i32
  }
  func.func @transform_2(%arg0: i32, %arg1: i32) -> (i32, i32) {
    %c0_i32 = arith.constant 0 : i32
    %c0_i32_0 = arith.constant 0 : i32
    %c0_i32_1 = arith.constant 0 : i32
    return %c0_i32, %c0_i32_0 : i32, i32
  }
  func.func @transform_3(%arg0: i32, %arg1: i32) -> (i32, i32, i32, i32, i32) {
    %c0_i32 = arith.constant 0 : i32
    %c0_i32_0 = arith.constant 0 : i32
    %c0_i32_1 = arith.constant 0 : i32
    %c0_i32_2 = arith.constant 0 : i32
    return %arg0, %c0_i32, %c0_i32_0, %arg1, %c0_i32_1 : i32, i32, i32, i32, i32
  }
  func.func @transform_4(%arg0: i32, %arg1: i32) -> (i32, i32, i32, i32, i32) {
    %c0_i32 = arith.constant 0 : i32
    %c0_i32_0 = arith.constant 0 : i32
    %c0_i32_1 = arith.constant 0 : i32
    %c0_i32_2 = arith.constant 0 : i32
    return %arg0, %c0_i32, %c0_i32_0, %arg1, %c0_i32_1 : i32, i32, i32, i32, i32
  }
  func.func @transform_5(%arg0: i32, %arg1: i32) -> (i32, i32, i32, i32) {
    %c0_i32 = arith.constant 0 : i32
    %c0_i32_0 = arith.constant 0 : i32
    %c0_i32_1 = arith.constant 0 : i32
    return %arg0, %c0_i32, %arg1, %c0_i32_0 : i32, i32, i32, i32
  }
}

</mosaic_0001>

<llo_original>
// kernel: tpu_custom_call.1
$region0: #{tpu_custom_call.1}
  #allocation0 [shape = 'u32[]', space=smem, size = 0x4, offset = 0x4, fixed_abs, tag = 'smem constant byte address 0x4 - core index']
  #allocation1 [shape = 'u32[144,128]{1,0:T(1,128)}', space=vmem, size = 0x12000, scoped, tag = 'internal scratch']
  %s0 = inlined_call_operand.vmem [shape: f32[2,2,9,9], index: 0, kind: input, shape index: {}]
  %s1 = inlined_call_operand.vmem [shape: f32[16,9], index: 1, kind: input, shape index: {}]
  %s2 = inlined_call_operand.vmem [shape: f32[9,16], index: 2, kind: input, shape index: {}]
  %s3 = inlined_call_operand.hbm [shape: f32[2,2,4,16,16], index: 3, kind: input, shape index: {}]
  %s4 = inlined_call_operand.hbm [shape: f32[2,2,5,16,16], index: 4, kind: input, shape index: {}]
  %s5 = inlined_call_operand.hbm [shape: f32[2,1,16,16], index: 5, kind: output, shape index: {}]
  %s6 = sld [smem:[#allocation0]]
  $region68: #{tpu_custom_call.1} parent=0
    _
  %s8 = ssub.s32 1, %s6
  %s9 = scalar_select 0, %s8, %s6
  $region1: #{tpu_custom_call.1} parent=0
    #allocation2 [shape = 'u8[131072]{0}', space=vmem, size = 0x20000, scoped, tag = 'input window, operand 3']
    #allocation3 [shape = 's32[2]{0}', space=sflag, size = 0x8, scoped, tag = 'scoped memory for tpu_custom_call.1']
    #allocation4 [shape = 's32[2]{0}', space=sflag, size = 0x8, scoped, tag = 'scoped memory for tpu_custom_call.1']
    #allocation5 [shape = 'u8[163840]{0}', space=vmem, size = 0x28000, scoped, tag = 'input window, operand 4']
    #allocation6 [shape = 's32[2]{0}', space=sflag, size = 0x8, scoped, tag = 'scoped memory for tpu_custom_call.1']
    #allocation7 [shape = 'u8[16384]{0}', space=vmem, size = 0x4000, scoped, tag = 'output window, operand 0']
    %10 = vsyncpa [#allocation3], 0
    %s11 = scalar_lea.sflag [#allocation3], 1
    %12 = vsyncpa %s11, 0
    %13 = vsyncpa [#allocation6], 0
    %s14 = scalar_lea.sflag [#allocation6], 1
    %15 = vsyncpa %s14, 0
    %16 = vsyncpa [#allocation4], 0
    %s17 = scalar_lea.sflag [#allocation4], 1
    %18 = vsyncpa %s17, 0
    loop: start=0, step=1, limit=4
    $region2: #{tpu_custom_call.1} parent=1 // loop_pre_header
      _
    $region3: #{tpu_custom_call.1} parent=1 // loop_header
      %s20 = sphi 0, %s24
      %p21 = scmp.ge.s32.totalorder %s20, 4
      %s27 = sphi 0, %s39
      %s28 = sphi 0, %s35
      %s29 = sphi 0, %s27
      %s30 = sphi 0, %s28
      %s31 = sphi 0, %s29
      %s32 = sphi 0, %s30
      %s42 = sphi 0, %s44
      %s45 = sphi 0, %s42
      %s46 = sphi 0, %s45
      %s62 = sphi 0, %s46
      %s68 = sphi 0, %s70
      %s71 = sphi 0, %s68
      %s72 = sphi 0, %s71
      %s88 = sphi 0, %s72
      %s92 = sphi 0, %s92
      %s94 = sphi 0, %s92
      %s95 = sphi 0, %s94
      %s109 = sphi 0, %s95
      %s117 = sphi 0, %s119
      %s120 = sphi 0, %s117
      %s121 = sphi 0, %s120
      %s137 = sphi 0, %s121
      %s145 = sphi 0, %s147
      %s148 = sphi 0, %s145
      %s149 = sphi 0, %s148
      %s165 = sphi 0, %s149
      %s173 = sphi 0, %s175
      %s176 = sphi 0, %s173
      %s177 = sphi 0, %s176
      %s193 = sphi 0, %s177
    $region4: #{tpu_custom_call.1} parent=1 // loop_header_branch
      %23 = sbr.rel (%p21) target = $region8
    $region5: #{tpu_custom_call.1} parent=1 // loop_body
      %s25 = ssub.s32 %s20, 1
      %s26 = ssub.s32 %s20, 2
      %s33 = sadd.s32 1, %s28
      %p34 = scmp.ge.s32.totalorder %s33, 1
      %s35 = scalar_select %p34, 0, %s33
      %s36 = sadd.s32 1, %s27
      %s37 = scalar_select %p34, %s36, %s27
      %p38 = scmp.ge.s32.totalorder %s37, 2
      %s39 = scalar_select %p38, 0, %s37
      %s40 = ssub.s32 %s27, %s39
      %p41 = scmp.eq.s32.totalorder %s40, 0
      %s43 = sadd.s32 %s42, 1
      %s44 = scalar_select %p41, %s42, %s43
      %p47 = pneg %p41
      %p48 = scmp.eq.s32.totalorder %s20, 1
      %p49 = por %p47, %p48
      %p50 = scmp.ne.s32.totalorder %s42, %s45
      %p51 = scmp.eq.s32.totalorder %s20, 0
      %p52 = por %p50, %p51
      %p53 = scmp.ne.s32.totalorder %s42, %s45
      %p54 = scmp.eq.s32.totalorder %s25, 1
      %p55 = por %p53, %p54
      %p56 = scmp.ne.s32.totalorder %s45, %s46
      %p57 = scmp.eq.s32.totalorder %s25, 0
      %p58 = por %p56, %p57
      %p59 = scmp.ne.s32.totalorder %s45, %s46
      %p60 = scmp.eq.s32.totalorder %s26, 1
      %p61 = por %p59, %p60
      %p63 = scmp.ne.s32.totalorder %s46, %s62
      %p64 = scmp.eq.s32.totalorder %s26, 0
      %p65 = por %p63, %p64
      %s66 = ssub.s32 %s28, %s35
      %p67 = scmp.eq.s32.totalorder %s66, 0
      %s69 = sadd.s32 %s68, 1
      %s70 = scalar_select %p67, %s68, %s69
      %p73 = pneg %p67
      %p74 = scmp.eq.s32.totalorder %s20, 1
      %p75 = por %p73, %p74
      %p76 = scmp.ne.s32.totalorder %s68, %s71
      %p77 = scmp.eq.s32.totalorder %s20, 0
      %p78 = por %p76, %p77
      %p79 = scmp.ne.s32.totalorder %s68, %s71
      %p80 = scmp.eq.s32.totalorder %s25, 1
      %p81 = por %p79, %p80
      %p82 = scmp.ne.s32.totalorder %s71, %s72
      %p83 = scmp.eq.s32.totalorder %s25, 0
      %p84 = por %p82, %p83
      %p85 = scmp.ne.s32.totalorder %s71, %s72
      %p86 = scmp.eq.s32.totalorder %s26, 1
      %p87 = por %p85, %p86
      %p89 = scmp.ne.s32.totalorder %s72, %s88
      %p90 = scmp.eq.s32.totalorder %s26, 0
      %p91 = por %p89, %p90
      %s93 = sadd.s32 %s92, 1
      %p96 = scmp.eq.s32.totalorder %s20, 1
      %p97 = scmp.ne.s32.totalorder %s92, %s94
      %p98 = scmp.eq.s32.totalorder %s20, 0
      %p99 = por %p97, %p98
      %p100 = scmp.ne.s32.totalorder %s92, %s94
      %p101 = scmp.eq.s32.totalorder %s25, 1
      %p102 = por %p100, %p101
      %p103 = scmp.ne.s32.totalorder %s94, %s95
      %p104 = scmp.eq.s32.totalorder %s25, 0
      %p105 = por %p103, %p104
      %p106 = scmp.ne.s32.totalorder %s94, %s95
      %p107 = scmp.eq.s32.totalorder %s26, 1
      %p108 = por %p106, %p107
      %p110 = scmp.ne.s32.totalorder %s95, %s109
      %p111 = scmp.eq.s32.totalorder %s26, 0
      %p112 = por %p110, %p111
      %s113 = ssub.s32 %s27, %s39
      %s114 = ssub.s32 %s28, %s35
      %s115 = sor.u32 %s113, %s114
      %p116 = scmp.eq.s32.totalorder %s115, 0
      %s118 = sadd.s32 %s117, 1
      %s119 = scalar_select %p116, %s117, %s118
      %p122 = pneg %p116
      %p123 = scmp.eq.s32.totalorder %s20, 1
      %p124 = por %p122, %p123
      %p125 = scmp.ne.s32.totalorder %s117, %s120
      %p126 = scmp.eq.s32.totalorder %s20, 0
      %p127 = por %p125, %p126
      %p128 = scmp.ne.s32.totalorder %s117, %s120
      %p129 = scmp.eq.s32.totalorder %s25, 1
      %p130 = por %p128, %p129
      %p131 = scmp.ne.s32.totalorder %s120, %s121
      %p132 = scmp.eq.s32.totalorder %s25, 0
      %p133 = por %p131, %p132
      %p134 = scmp.ne.s32.totalorder %s120, %s121
      %p135 = scmp.eq.s32.totalorder %s26, 1
      %p136 = por %p134, %p135
      %p138 = scmp.ne.s32.totalorder %s121, %s137
      %p139 = scmp.eq.s32.totalorder %s26, 0
      %p140 = por %p138, %p139
      %s141 = ssub.s32 %s27, %s39
      %s142 = ssub.s32 %s28, %s35
      %s143 = sor.u32 %s141, %s142
      %p144 = scmp.eq.s32.totalorder %s143, 0
      %s146 = sadd.s32 %s145, 1
      %s147 = scalar_select %p144, %s145, %s146
      %p150 = pneg %p144
      %p151 = scmp.eq.s32.totalorder %s20, 1
      %p152 = por %p150, %p151
      %p153 = scmp.ne.s32.totalorder %s145, %s148
      %p154 = scmp.eq.s32.totalorder %s20, 0
      %p155 = por %p153, %p154
      %p156 = scmp.ne.s32.totalorder %s145, %s148
      %p157 = scmp.eq.s32.totalorder %s25, 1
      %p158 = por %p156, %p157
      %p159 = scmp.ne.s32.totalorder %s148, %s149
      %p160 = scmp.eq.s32.totalorder %s25, 0
      %p161 = por %p159, %p160
      %p162 = scmp.ne.s32.totalorder %s148, %s149
      %p163 = scmp.eq.s32.totalorder %s26, 1
      %p164 = por %p162, %p163
      %p166 = scmp.ne.s32.totalorder %s149, %s165
      %p167 = scmp.eq.s32.totalorder %s26, 0
      %p168 = por %p166, %p167
      %s169 = ssub.s32 %s27, %s39
      %s170 = ssub.s32 %s28, %s35
      %s171 = sor.u32 %s169, %s170
      %p172 = scmp.eq.s32.totalorder %s171, 0
      %s174 = sadd.s32 %s173, 1
      %s175 = scalar_select %p172, %s173, %s174
      %p178 = pneg %p172
      %p179 = scmp.eq.s32.totalorder %s20, 1
      %p180 = por %p178, %p179
      %p181 = scmp.ne.s32.totalorder %s173, %s176
      %p182 = scmp.eq.s32.totalorder %s20, 0
      %p183 = por %p181, %p182
      %p184 = scmp.ne.s32.totalorder %s173, %s176
      %p185 = scmp.eq.s32.totalorder %s25, 1
      %p186 = por %p184, %p185
      %p187 = scmp.ne.s32.totalorder %s176, %s177
      %p188 = scmp.eq.s32.totalorder %s25, 0
      %p189 = por %p187, %p188
      %p190 = scmp.ne.s32.totalorder %s176, %s177
      %p191 = scmp.eq.s32.totalorder %s26, 1
      %p192 = por %p190, %p191
      %p194 = scmp.ne.s32.totalorder %s177, %s193
      %p195 = scmp.eq.s32.totalorder %s26, 0
      %p196 = por %p194, %p195
      %p197 = scmp.le.s32.totalorder 1, %s20
      %p198 = scmp.lt.s32.totalorder %s20, 3
      %p199 = pnand %p197, %p198
      %p200 = pneg %p199
      // Predicated region
      $region9: #{tpu_custom_call.1} parent=5 // pred_check
        _
      $region10: #{tpu_custom_call.1} parent=5 // pred_check_branch
        %202 = sbr.rel (%p199) target = $region12
      $region11: #{tpu_custom_call.1} parent=5 // pred_region
        %s203 = ssub.s32 %s20, 1
        // Predicated region
        $region13: #{tpu_custom_call.1} parent=11 // pred_check
          %p204 = pneg %p84
        $region14: #{tpu_custom_call.1} parent=11 // pred_check_branch
          %206 = sbr.rel (%p204) target = $region16
        $region15: #{tpu_custom_call.1} parent=11 // pred_region
          %s207 = smul.u32 2, %s30
          %p208 = scmp.lt.s32.totalorder %s207, 1
          %s209 = scalar_select %p208, %s207, 1
          %s210 = smul.addr %s209, 8
          %s211 = scalar_lea.vmem %s1, %s210
          %s212 = smul.u32 2, %s30
        $region16: #{tpu_custom_call.1} parent=11 // pred_fallthru
          _
        // Predicated region
        $region17: #{tpu_custom_call.1} parent=11 // pred_check
          %p213 = pneg %p105
        $region18: #{tpu_custom_call.1} parent=11 // pred_check_branch
          %215 = sbr.rel (%p213) target = $region20
        $region19: #{tpu_custom_call.1} parent=11 // pred_region
          _
        $region20: #{tpu_custom_call.1} parent=11 // pred_fallthru
          _
      $region12: #{tpu_custom_call.1} parent=5 // pred_fallthru
        _
      %p216 = scmp.lt.s32.totalorder %s20, 2
      // Predicated region
      $region21: #{tpu_custom_call.1} parent=5 // pred_check
        %p217 = pneg %p216
      $region22: #{tpu_custom_call.1} parent=5 // pred_check_branch
        %219 = sbr.rel (%p217) target = $region24
      $region23: #{tpu_custom_call.1} parent=5 // pred_region
        // Predicated region
        $region25: #{tpu_custom_call.1} parent=23 // pred_check
          %p220 = pneg %p52
        $region26: #{tpu_custom_call.1} parent=23 // pred_check_branch
          %222 = sbr.rel (%p220) target = $region28
        $region27: #{tpu_custom_call.1} parent=23 // pred_region
          %p223 = scmp.lt.s32.totalorder %s27, 1
          %s224 = scalar_select %p223, %s27, 1
          %s225 = smul.addr %s224, 4
          %s226 = smul.addr %s225, 8
          %s227 = scalar_lea.vmem %s0, %s226
        $region28: #{tpu_custom_call.1} parent=23 // pred_fallthru
          _
        // Predicated region
        $region29: #{tpu_custom_call.1} parent=23 // pred_check
          %p228 = pneg %p127
        $region30: #{tpu_custom_call.1} parent=23 // pred_check_branch
          %230 = sbr.rel (%p228) target = $region32
        $region31: #{tpu_custom_call.1} parent=23 // pred_region
          %s231 = sand.u32 %s117, 1
          %s232 = scalar_lea.sflag [#allocation3], %s231
          %s233 = sand.u32 %s117, 1
          %s234 = smul.addr %s233, 128
          %s235 = scalar_lea.vmem [#allocation2], %s234
          %s236 = smul.u32 2, %s28
          %s238 = ssub.s32 2048, 2048
          %239 = vsyncadd %s232, %s238
          %s240 = smul.addr %s27, 16
          %s241 = sadd.s32 %s236, %s240
          %s242 = smul.addr %s241, 128
          %s243 = scalar_lea.hbm %s3, %s242
          %s244 = sshll.u32 %s235, 4
          %s245 = int_to_ptr.vmem [resolvable:$true] %s244
          %250 = dma.hbm_to_vmem [thread:$0]  %s243, 2048, %s245, %s232, 128, 128, 8
        $region32: #{tpu_custom_call.1} parent=23 // pred_fallthru
          _
        // Predicated region
        $region33: #{tpu_custom_call.1} parent=23 // pred_check
          %p251 = pneg %p155
        $region34: #{tpu_custom_call.1} parent=23 // pred_check_branch
          %253 = sbr.rel (%p251) target = $region36
        $region35: #{tpu_custom_call.1} parent=23 // pred_region
          %s254 = sand.u32 %s145, 1
          %s255 = scalar_lea.sflag [#allocation6], %s254
          %s256 = sand.u32 %s145, 1
          %s257 = smul.addr %s256, 160
          %s258 = scalar_lea.vmem [#allocation5], %s257
          %s259 = smul.u32 2, %s28
          %s261 = ssub.s32 2560, 2560
          %262 = vsyncadd %s255, %s261
          %s263 = smul.addr %s27, 20
          %s264 = sadd.s32 %s259, %s263
          %s265 = smul.addr %s264, 128
          %s266 = scalar_lea.hbm %s4, %s265
          %s267 = sshll.u32 %s258, 4
          %s268 = int_to_ptr.vmem [resolvable:$true] %s267
          %273 = dma.hbm_to_vmem [thread:$0]  %s266, 2560, %s268, %s255, 128, 128, 8
        $region36: #{tpu_custom_call.1} parent=23 // pred_fallthru
          _
      $region24: #{tpu_custom_call.1} parent=5 // pred_fallthru
        _
      %p274 = scmp.le.s32.totalorder 1, %s20
      %p275 = scmp.lt.s32.totalorder %s20, 3
      %p276 = pnand %p274, %p275
      %p277 = pneg %p276
      // Predicated region
      $region37: #{tpu_custom_call.1} parent=5 // pred_check
        _
      $region38: #{tpu_custom_call.1} parent=5 // pred_check_branch
        %279 = sbr.rel (%p276) target = $region40
      $region39: #{tpu_custom_call.1} parent=5 // pred_region
        %s280 = ssub.s32 %s20, 1
        %s281 = sand.u32 %s120, 1
        %s282 = scalar_lea.sflag [#allocation3], %s281
        %s283 = sand.u32 %s120, 1
        %s284 = smul.addr %s283, 128
        %s285 = scalar_lea.vmem [#allocation2], %s284
        // Predicated region
        $region41: #{tpu_custom_call.1} parent=39 // pred_check
          %p286 = pneg %p133
        $region42: #{tpu_custom_call.1} parent=39 // pred_check_branch
          %288 = sbr.rel (%p286) target = $region44
        $region43: #{tpu_custom_call.1} parent=39 // pred_region
          %289 = dma.done %s282, 2048
        $region44: #{tpu_custom_call.1} parent=39 // pred_fallthru
          _
        %s290 = sand.u32 %s148, 1
        %s291 = scalar_lea.sflag [#allocation6], %s290
        %s292 = sand.u32 %s148, 1
        %s293 = smul.addr %s292, 160
        %s294 = scalar_lea.vmem [#allocation5], %s293
        // Predicated region
        $region45: #{tpu_custom_call.1} parent=39 // pred_check
          %p295 = pneg %p161
        $region46: #{tpu_custom_call.1} parent=39 // pred_check_branch
          %297 = sbr.rel (%p295) target = $region48
        $region47: #{tpu_custom_call.1} parent=39 // pred_region
          %298 = dma.done %s291, 2560
        $region48: #{tpu_custom_call.1} parent=39 // pred_fallthru
          _
        %p299 = scmp.lt.s32.totalorder %s29, 1
        %s300 = scalar_select %p299, %s29, 1
        %s301 = smul.addr %s300, 4
        %s302 = smul.addr %s301, 8
        %s303 = scalar_lea.vmem %s0, %s302
        %p304 = pneg %p58
        %p305 = pneg %p55
        %s306 = smul.u32 2, %s30
        %p307 = scmp.lt.s32.totalorder %s306, 1
        %s308 = scalar_select %p307, %s306, 1
        %s309 = smul.addr %s308, 8
        %s310 = scalar_lea.vmem %s1, %s309
        %p311 = pneg %p84
        %p312 = pneg %p81
        %p313 = pneg %p105
        %p314 = pneg %p102
        %s315 = sand.u32 %s120, 1
        %s316 = scalar_lea.sflag [#allocation3], %s315
        %s317 = sand.u32 %s120, 1
        %s318 = smul.addr %s317, 128
        %s319 = scalar_lea.vmem [#allocation2], %s318
        %p320 = pneg %p133
        %p321 = pneg %p130
        %s322 = sand.u32 %s148, 1
        %s323 = scalar_lea.sflag [#allocation6], %s322
        %s324 = sand.u32 %s148, 1
        %s325 = smul.addr %s324, 160
        %s326 = scalar_lea.vmem [#allocation5], %s325
        %p327 = pneg %p161
        %p328 = pneg %p158
        %p329 = pneg %p189
        %p330 = pneg %p186
        %s331 = sand.u32 %s176, 1
        %s332 = scalar_lea.sflag [#allocation4], %s331
        %s333 = sand.u32 %s176, 1
        %s334 = smul.addr %s333, 16
        %s335 = scalar_lea.vmem [#allocation7], %s334
        %p336 = scmp.lt.s32.totalorder %s29, 1
        %s337 = scalar_select %p336, %s29, 1
        %s338 = smul.addr %s337, 4
        %s339 = smul.addr %s338, 8
        %s340 = scalar_lea.vmem %s0, %s339
        %s341 = smul.u32 2, %s30
        %p342 = scmp.lt.s32.totalorder %s341, 1
        %s343 = scalar_select %p342, %s341, 1
        %s344 = smul.addr %s343, 8
        %s345 = scalar_lea.vmem %s1, %s344
        %s346 = smul.u32 2, %s30
        %s347 = smul.u32 2, %s30
        %s348 = smul.u32 2, %s30
        %s349 = smul.u32 2, %s30
        %v350 = vld [vmem:[%s345] sm:$0xff]
        %v351 = vld [vmem:[%s345 + $0x8] sm:$0xff]
        %v352 = vld [vmem:[%s2] sm:$0xff]
        %v353 = vld [vmem:[%s2 + $0x8] sm:$0x1]
        %v354 = vld [vmem:[%s340] sm:$0xff]
        %v355 = vld [vmem:[%s340 + $0x8] sm:$0x1]
        %s356 = scalar_lea.vmem %s340, 16
        %v357 = vld [vmem:[%s356] sm:$0xff]
        %v358 = vld [vmem:[%s356 + $0x8] sm:$0x1]
        %vm359 = vcmask 72704
        %v361 = vsel %vm359, %v350, 0
        %v364 = vsel %vm359, %v351, 0
        %vm366 = vcmask 1040384
        %v368 = vsel %vm366, %v355, 0
        %370 = vmatprep.subr.mxu0 0.0
        %371 = vmatpush1.msra.mxu0 %v354
        %372 = vmatprep.subr.mxu0 0.0
        %373 = vmatpush1.msra.mxu0 %v368
        %374 = vmatprep.subr.mxu0 0.0
        %375 = vmatpush1.msra.mxu0 0.0
        %376 = vmatprep.subr.mxu0 0.0
        %377 = vmatpush1.msra.mxu0 0.0
        %378 = vmatprep.subr.mxu0 0.0
        %379 = vmatpush1.msra.mxu0 0.0
        %380 = vmatprep.subr.mxu0 0.0
        %381 = vmatpush1.msra.mxu0 0.0
        %382 = vmatprep.subr.mxu0 0.0
        %383 = vmatpush1.msra.mxu0 0.0
        %384 = vmatprep.subr.mxu0 0.0
        %385 = vmatpush1.msra.mxu0 0.0
        %386 = vmatprep.subr.mxu0 0.0
        %387 = vmatpush1.msra.mxu0 0.0
        %388 = vmatprep.subr.mxu0 0.0
        %389 = vmatpush1.msra.mxu0 0.0
        %390 = vmatprep.subr.mxu0 0.0
        %391 = vmatpush1.msra.mxu0 0.0
        %392 = vmatprep.subr.mxu0 0.0
        %393 = vmatpush1.msra.mxu0 0.0
        %394 = vmatprep.subr.mxu0 0.0
        %395 = vmatpush1.msra.mxu0 0.0
        %396 = vmatprep.subr.mxu0 0.0
        %397 = vmatpush1.msra.mxu0 0.0
        %398 = vmatprep.subr.mxu0 0.0
        %399 = vmatpush1.msra.mxu0 0.0
        %400 = vmatprep.subr.mxu0 0.0
        %401 = vmatpush1.msra.mxu0 0.0
        %402 = vmatprep.subr.mxu0 0.0
        %403 = vmatpush1.msra.mxu0 0.0
        %404 = vmatprep.subr.mxu0 0.0
        %405 = vmatpush1.msra.mxu0 0.0
        %406 = vmatprep.subr.mxu0 0.0
        %407 = vmatpush1.msra.mxu0 0.0
        %408 = vmatprep.subr.mxu0 0.0
        %409 = vmatpush1.msra.mxu0 0.0
        %410 = vmatprep.subr.mxu0 0.0
        %411 = vmatpush1.msra.mxu0 0.0
        %412 = vmatprep.subr.mxu0 0.0
        %413 = vmatpush1.msra.mxu0 0.0
        %414 = vmatprep.subr.mxu0 0.0
        %415 = vmatpush1.msra.mxu0 0.0
        %416 = vmatprep.subr.mxu0 0.0
        %417 = vmatpush1.msra.mxu0 0.0
        %418 = vmatprep.subr.mxu0 0.0
        %419 = vmatpush1.msra.mxu0 0.0
        %420 = vmatprep.subr.mxu0 0.0
        %421 = vmatpush1.msra.mxu0 0.0
        %422 = vmatprep.subr.mxu0 0.0
        %423 = vmatpush1.msra.mxu0 0.0
        %424 = vmatprep.subr.mxu0 0.0
        %425 = vmatpush1.msra.mxu0 0.0
        %426 = vmatprep.subr.mxu0 0.0
        %427 = vmatpush1.msra.mxu0 0.0
        %428 = vmatprep.subr.mxu0 0.0
        %429 = vmatpush1.msra.mxu0 0.0
        %430 = vmatprep.subr.mxu0 0.0
        %431 = vmatpush1.msra.mxu0 0.0
        %432 = vmatprep.subr.mxu0 0.0
        %433 = vmatpush1.msra.mxu0 0.0
        %434 = vmatprep.mubr.f32.mxu0 0.0
        %435 = vmatmul.mubr.f32.gmra.mrb[0].mxu0 %v361
        %v436 = vpop.f32.mrb[0].mxu0
        %v437 = vadd.f32 0.0, %v436
        %v438 = vpop.f32.mrb[0].mxu0
        %439 = vmatprep.mubr.f32.mxu0 0.0
        %440 = vmatmul.mubr.f32.gmra.mrb[0].mxu0 %v364
        %v441 = vpop.f32.mrb[0].mxu0
        %v442 = vadd.f32 0.0, %v441
        %v443 = vpop.f32.mrb[0].mxu0
        %444 = vdwg.mxu0
        %v446 = vsel %vm359, %v437, 0
        %v449 = vsel %vm359, %v442, 0
        %v452 = vsel %vm366, %v353, 0
        %454 = vmatprep.subr.mxu0 0.0
        %455 = vmatpush1.msra.mxu0 %v352
        %456 = vmatprep.subr.mxu0 0.0
        %457 = vmatpush1.msra.mxu0 %v452
        %458 = vmatprep.subr.mxu0 0.0
        %459 = vmatpush1.msra.mxu0 0.0
        %460 = vmatprep.subr.mxu0 0.0
        %461 = vmatpush1.msra.mxu0 0.0
        %462 = vmatprep.subr.mxu0 0.0
        %463 = vmatpush1.msra.mxu0 0.0
        %464 = vmatprep.subr.mxu0 0.0
        %465 = vmatpush1.msra.mxu0 0.0
        %466 = vmatprep.subr.mxu0 0.0
        %467 = vmatpush1.msra.mxu0 0.0
        %468 = vmatprep.subr.mxu0 0.0
        %469 = vmatpush1.msra.mxu0 0.0
        %470 = vmatprep.subr.mxu0 0.0
        %471 = vmatpush1.msra.mxu0 0.0
        %472 = vmatprep.subr.mxu0 0.0
        %473 = vmatpush1.msra.mxu0 0.0
        %474 = vmatprep.subr.mxu0 0.0
        %475 = vmatpush1.msra.mxu0 0.0
        %476 = vmatprep.subr.mxu0 0.0
        %477 = vmatpush1.msra.mxu0 0.0
        %478 = vmatprep.subr.mxu0 0.0
        %479 = vmatpush1.msra.mxu0 0.0
        %480 = vmatprep.subr.mxu0 0.0
        %481 = vmatpush1.msra.mxu0 0.0
        %482 = vmatprep.subr.mxu0 0.0
        %483 = vmatpush1.msra.mxu0 0.0
        %484 = vmatprep.subr.mxu0 0.0
        %485 = vmatpush1.msra.mxu0 0.0
        %486 = vmatprep.subr.mxu0 0.0
        %487 = vmatpush1.msra.mxu0 0.0
        %488 = vmatprep.subr.mxu0 0.0
        %489 = vmatpush1.msra.mxu0 0.0
        %490 = vmatprep.subr.mxu0 0.0
        %491 = vmatpush1.msra.mxu0 0.0
        %492 = vmatprep.subr.mxu0 0.0
        %493 = vmatpush1.msra.mxu0 0.0
        %494 = vmatprep.subr.mxu0 0.0
        %495 = vmatpush1.msra.mxu0 0.0
        %496 = vmatprep.subr.mxu0 0.0
        %497 = vmatpush1.msra.mxu0 0.0
        %498 = vmatprep.subr.mxu0 0.0
        %499 = vmatpush1.msra.mxu0 0.0
        %500 = vmatprep.subr.mxu0 0.0
        %501 = vmatpush1.msra.mxu0 0.0
        %502 = vmatprep.subr.mxu0 0.0
        %503 = vmatpush1.msra.mxu0 0.0
        %504 = vmatprep.subr.mxu0 0.0
        %505 = vmatpush1.msra.mxu0 0.0
        %506 = vmatprep.subr.mxu0 0.0
        %507 = vmatpush1.msra.mxu0 0.0
        %508 = vmatprep.subr.mxu0 0.0
        %509 = vmatpush1.msra.mxu0 0.0
        %510 = vmatprep.subr.mxu0 0.0
        %511 = vmatpush1.msra.mxu0 0.0
        %512 = vmatprep.subr.mxu0 0.0
        %513 = vmatpush1.msra.mxu0 0.0
        %514 = vmatprep.subr.mxu0 0.0
        %515 = vmatpush1.msra.mxu0 0.0
        %516 = vmatprep.subr.mxu0 0.0
        %517 = vmatpush1.msra.mxu0 0.0
        %518 = vmatprep.mubr.f32.mxu0 0.0
        %519 = vmatmul.mubr.f32.gmra.mrb[0].mxu0 %v446
        %v520 = vpop.f32.mrb[0].mxu0
        %v521 = vadd.f32 0.0, %v520
        %v522 = vpop.f32.mrb[0].mxu0
        %523 = vmatprep.mubr.f32.mxu0 0.0
        %524 = vmatmul.mubr.f32.gmra.mrb[0].mxu0 %v449
        %v525 = vpop.f32.mrb[0].mxu0
        %v526 = vadd.f32 0.0, %v525
        %v527 = vpop.f32.mrb[0].mxu0
        %528 = vdwg.mxu0
        %v530 = vsel %vm366, %v358, 0
        %532 = vmatprep.subr.mxu0 0.0
        %533 = vmatpush1.msra.mxu0 %v357
        %534 = vmatprep.subr.mxu0 0.0
        %535 = vmatpush1.msra.mxu0 %v530
        %536 = vmatprep.subr.mxu0 0.0
        %537 = vmatpush1.msra.mxu0 0.0
        %538 = vmatprep.subr.mxu0 0.0
        %539 = vmatpush1.msra.mxu0 0.0
        %540 = vmatprep.subr.mxu0 0.0
        %541 = vmatpush1.msra.mxu0 0.0
        %542 = vmatprep.subr.mxu0 0.0
        %543 = vmatpush1.msra.mxu0 0.0
        %544 = vmatprep.subr.mxu0 0.0
        %545 = vmatpush1.msra.mxu0 0.0
        %546 = vmatprep.subr.mxu0 0.0
        %547 = vmatpush1.msra.mxu0 0.0
        %548 = vmatprep.subr.mxu0 0.0
        %549 = vmatpush1.msra.mxu0 0.0
        %550 = vmatprep.subr.mxu0 0.0
        %551 = vmatpush1.msra.mxu0 0.0
        %552 = vmatprep.subr.mxu0 0.0
        %553 = vmatpush1.msra.mxu0 0.0
        %554 = vmatprep.subr.mxu0 0.0
        %555 = vmatpush1.msra.mxu0 0.0
        %556 = vmatprep.subr.mxu0 0.0
        %557 = vmatpush1.msra.mxu0 0.0
        %558 = vmatprep.subr.mxu0 0.0
        %559 = vmatpush1.msra.mxu0 0.0
        %560 = vmatprep.subr.mxu0 0.0
        %561 = vmatpush1.msra.mxu0 0.0
        %562 = vmatprep.subr.mxu0 0.0
        %563 = vmatpush1.msra.mxu0 0.0
        %564 = vmatprep.subr.mxu0 0.0
        %565 = vmatpush1.msra.mxu0 0.0
        %566 = vmatprep.subr.mxu0 0.0
        %567 = vmatpush1.msra.mxu0 0.0
        %568 = vmatprep.subr.mxu0 0.0
        %569 = vmatpush1.msra.mxu0 0.0
        %570 = vmatprep.subr.mxu0 0.0
        %571 = vmatpush1.msra.mxu0 0.0
        %572 = vmatprep.subr.mxu0 0.0
        %573 = vmatpush1.msra.mxu0 0.0
        %574 = vmatprep.subr.mxu0 0.0
        %575 = vmatpush1.msra.mxu0 0.0
        %576 = vmatprep.subr.mxu0 0.0
        %577 = vmatpush1.msra.mxu0 0.0
        %578 = vmatprep.subr.mxu0 0.0
        %579 = vmatpush1.msra.mxu0 0.0
        %580 = vmatprep.subr.mxu0 0.0
        %581 = vmatpush1.msra.mxu0 0.0
        %582 = vmatprep.subr.mxu0 0.0
        %583 = vmatpush1.msra.mxu0 0.0
        %584 = vmatprep.subr.mxu0 0.0
        %585 = vmatpush1.msra.mxu0 0.0
        %586 = vmatprep.subr.mxu0 0.0
        %587 = vmatpush1.msra.mxu0 0.0
        %588 = vmatprep.subr.mxu0 0.0
        %589 = vmatpush1.msra.mxu0 0.0
        %590 = vmatprep.subr.mxu0 0.0
        %591 = vmatpush1.msra.mxu0 0.0
        %592 = vmatprep.subr.mxu0 0.0
        %593 = vmatpush1.msra.mxu0 0.0
        %594 = vmatprep.subr.mxu0 0.0
        %595 = vmatpush1.msra.mxu0 0.0
        %596 = vmatprep.mubr.f32.mxu0 0.0
        %597 = vmatmul.mubr.f32.gmra.mrb[0].mxu0 %v361
        %v598 = vpop.f32.mrb[0].mxu0
        %v599 = vadd.f32 0.0, %v598
        %v600 = vpop.f32.mrb[0].mxu0
        %601 = vmatprep.mubr.f32.mxu0 0.0
        %602 = vmatmul.mubr.f32.gmra.mrb[0].mxu0 %v364
        %v603 = vpop.f32.mrb[0].mxu0
        %v604 = vadd.f32 0.0, %v603
        %v605 = vpop.f32.mrb[0].mxu0
        %606 = vdwg.mxu0
        %v608 = vsel %vm359, %v599, 0
        %v611 = vsel %vm359, %v604, 0
        %613 = vmatprep.subr.mxu0 0.0
        %614 = vmatpush1.msra.mxu0 %v352
        %615 = vmatprep.subr.mxu0 0.0
        %616 = vmatpush1.msra.mxu0 %v452
        %617 = vmatprep.subr.mxu0 0.0
        %618 = vmatpush1.msra.mxu0 0.0
        %619 = vmatprep.subr.mxu0 0.0
        %620 = vmatpush1.msra.mxu0 0.0
        %621 = vmatprep.subr.mxu0 0.0
        %622 = vmatpush1.msra.mxu0 0.0
        %623 = vmatprep.subr.mxu0 0.0
        %624 = vmatpush1.msra.mxu0 0.0
        %625 = vmatprep.subr.mxu0 0.0
        %626 = vmatpush1.msra.mxu0 0.0
        %627 = vmatprep.subr.mxu0 0.0
        %628 = vmatpush1.msra.mxu0 0.0
        %629 = vmatprep.subr.mxu0 0.0
        %630 = vmatpush1.msra.mxu0 0.0
        %631 = vmatprep.subr.mxu0 0.0
        %632 = vmatpush1.msra.mxu0 0.0
        %633 = vmatprep.subr.mxu0 0.0
        %634 = vmatpush1.msra.mxu0 0.0
        %635 = vmatprep.subr.mxu0 0.0
        %636 = vmatpush1.msra.mxu0 0.0
        %637 = vmatprep.subr.mxu0 0.0
        %638 = vmatpush1.msra.mxu0 0.0
        %639 = vmatprep.subr.mxu0 0.0
        %640 = vmatpush1.msra.mxu0 0.0
        %641 = vmatprep.subr.mxu0 0.0
        %642 = vmatpush1.msra.mxu0 0.0
        %643 = vmatprep.subr.mxu0 0.0
        %644 = vmatpush1.msra.mxu0 0.0
        %645 = vmatprep.subr.mxu0 0.0
        %646 = vmatpush1.msra.mxu0 0.0
        %647 = vmatprep.subr.mxu0 0.0
        %648 = vmatpush1.msra.mxu0 0.0
        %649 = vmatprep.subr.mxu0 0.0
        %650 = vmatpush1.msra.mxu0 0.0
        %651 = vmatprep.subr.mxu0 0.0
        %652 = vmatpush1.msra.mxu0 0.0
        %653 = vmatprep.subr.mxu0 0.0
        %654 = vmatpush1.msra.mxu0 0.0
        %655 = vmatprep.subr.mxu0 0.0
        %656 = vmatpush1.msra.mxu0 0.0
        %657 = vmatprep.subr.mxu0 0.0
        %658 = vmatpush1.msra.mxu0 0.0
        %659 = vmatprep.subr.mxu0 0.0
        %660 = vmatpush1.msra.mxu0 0.0
        %661 = vmatprep.subr.mxu0 0.0
        %662 = vmatpush1.msra.mxu0 0.0
        %663 = vmatprep.subr.mxu0 0.0
        %664 = vmatpush1.msra.mxu0 0.0
        %665 = vmatprep.subr.mxu0 0.0
        %666 = vmatpush1.msra.mxu0 0.0
        %667 = vmatprep.subr.mxu0 0.0
        %668 = vmatpush1.msra.mxu0 0.0
        %669 = vmatprep.subr.mxu0 0.0
        %670 = vmatpush1.msra.mxu0 0.0
        %671 = vmatprep.subr.mxu0 0.0
        %672 = vmatpush1.msra.mxu0 0.0
        %673 = vmatprep.subr.mxu0 0.0
        %674 = vmatpush1.msra.mxu0 0.0
        %675 = vmatprep.subr.mxu0 0.0
        %676 = vmatpush1.msra.mxu0 0.0
        %677 = vmatprep.mubr.f32.mxu0 0.0
        %678 = vmatmul.mubr.f32.gmra.mrb[0].mxu0 %v608
        %v679 = vpop.f32.mrb[0].mxu0
        %v680 = vadd.f32 0.0, %v679
        %v681 = vpop.f32.mrb[0].mxu0
        %682 = vmatprep.mubr.f32.mxu0 0.0
        %683 = vmatmul.mubr.f32.gmra.mrb[0].mxu0 %v611
        %v684 = vpop.f32.mrb[0].mxu0
        %v685 = vadd.f32 0.0, %v684
        %v686 = vpop.f32.mrb[0].mxu0
        %687 = vdwg.mxu0
        %v688 = vmax.f32 %v521, 0.001
        %v689 = vmax.f32 %v526, 0.001
        %v690 = vmax.f32 %v680, 0.001
        %v691 = vmax.f32 %v685, 0.001
        %vm692 = vcmp.lt.f32.partialorder %v688, 1.0
        %vm693 = vcmp.lt.f32.partialorder %v689, 1.0
        %vm694 = vcmp.lt.f32.partialorder %v690, 1.0
        %vm695 = vcmp.lt.f32.partialorder %v691, 1.0
        %v696 = vadd.f32 %v688, 1.0
        %v697 = vadd.f32 %v689, 1.0
        %v698 = vadd.f32 %v690, 1.0
        %v699 = vadd.f32 %v691, 1.0
        %v700 = vsel %vm692, %v696, %v688
        %v701 = vsel %vm693, %v697, %v689
        %v702 = vsel %vm694, %v698, %v690
        %v703 = vsel %vm695, %v699, %v691
        %v704 = vsub.f32 %v700, 0.33333334
        %v705 = vsub.f32 %v701, 0.33333334
        %v706 = vsub.f32 %v702, 0.33333334
        %v707 = vsub.f32 %v703, 0.33333334
        %v708 = vmul.f32 %v704, 9.0
        %v709 = vmul.f32 %v705, 9.0
        %v710 = vmul.f32 %v706, 9.0
        %v711 = vmul.f32 %v707, 9.0
        %v712 = vrsqrt.pop %v708
        %v713 = vrsqrt.pop %v709
        %v714 = vrsqrt.pop %v710
        %v715 = vrsqrt.pop %v711
        loop: start=0, step=1, limit=4
        $region49: #{tpu_custom_call.1} parent=39 // loop_pre_header
          _
        $region50: #{tpu_custom_call.1} parent=39 // loop_header
          %s717 = sphi 0, %s721
          %p718 = scmp.ge.s32.totalorder %s717, 4
          %v722 = vphi %v704, %v825
          %v723 = vphi %v705, %v826
          %v724 = vphi %v706, %v827
          %v725 = vphi %v707, %v828
          %v726 = vphi 0.0, %v837
          %v727 = vphi 0.0, %v838
          %v728 = vphi 0.0, %v839
          %v729 = vphi 0.0, %v840
        $region51: #{tpu_custom_call.1} parent=39 // loop_header_branch
          %720 = sbr.rel (%p718) target = $region55
        $region52: #{tpu_custom_call.1} parent=39 // loop_body
          %s730 = smul.u32 %s717, 16
          %s731 = scalar_lea.vmem %s285, %s730 [#allocation2]
          %v732 = vld [vmem:[%s731] sm:$0xff]
          %v733 = vld [vmem:[%s731 + $0x8] sm:$0xff]
          %v734 = vld [vmem:[%s731 + $0x40] sm:$0xff]
          %v735 = vld [vmem:[%s731 + $0x48] sm:$0xff]
          %s736 = scalar_lea.vmem %s294, %s730 [#allocation5]
          %v737 = vld [vmem:[%s736] sm:$0xff]
          %v738 = vld [vmem:[%s736 + $0x8] sm:$0xff]
          %v739 = vld [vmem:[%s736 + $0x50] sm:$0xff]
          %v740 = vld [vmem:[%s736 + $0x58] sm:$0xff]
          %v741 = vmul.f32 %v712, %v732
          %v742 = vmul.f32 %v713, %v733
          %v743 = vmul.f32 %v714, %v734
          %v744 = vmul.f32 %v715, %v735
          %v745 = vadd.f32 %v741, 1.0
          %v746 = vadd.f32 %v742, 1.0
          %v747 = vadd.f32 %v743, 1.0
          %v748 = vadd.f32 %v744, 1.0
          %v749 = vmul.f32 %v745, %v745
          %v750 = vmul.f32 %v746, %v746
          %v751 = vmul.f32 %v747, %v747
          %v752 = vmul.f32 %v748, %v748
          %v753 = vmul.f32 %v749, %v745
          %v754 = vmul.f32 %v750, %v746
          %v755 = vmul.f32 %v751, %v747
          %v756 = vmul.f32 %v752, %v748
          %v757 = vmax.f32 %v753, 1e-30
          %v758 = vmax.f32 %v754, 1e-30
          %v759 = vmax.f32 %v755, 1e-30
          %v760 = vmax.f32 %v756, 1e-30
          %v761 = vlog2.pop %v757
          %v762 = vmul.f32 %v761, 0.6931472
          %v763 = vlog2.pop %v758
          %v764 = vmul.f32 %v763, 0.6931472
          %v765 = vlog2.pop %v759
          %v766 = vmul.f32 %v765, 0.6931472
          %v767 = vlog2.pop %v760
          %v768 = vmul.f32 %v767, 0.6931472
          %vm769 = vcmp.gt.f32.partialorder %v753, 0.0
          %vm770 = vcmp.gt.f32.partialorder %v754, 0.0
          %vm771 = vcmp.gt.f32.partialorder %v755, 0.0
          %vm772 = vcmp.gt.f32.partialorder %v756, 0.0
          %v773 = vlog2.pop %v737
          %v774 = vmul.f32 %v773, 0.6931472
          %v775 = vlog2.pop %v738
          %v776 = vmul.f32 %v775, 0.6931472
          %v777 = vlog2.pop %v739
          %v778 = vmul.f32 %v777, 0.6931472
          %v779 = vlog2.pop %v740
          %v780 = vmul.f32 %v779, 0.6931472
          %v781 = vmul.f32 %v732, 0.5
          %v782 = vmul.f32 %v733, 0.5
          %v783 = vmul.f32 %v734, 0.5
          %v784 = vmul.f32 %v735, 0.5
          %v785 = vmul.f32 %v781, %v732
          %v786 = vmul.f32 %v782, %v733
          %v787 = vmul.f32 %v783, %v734
          %v788 = vmul.f32 %v784, %v735
          %v789 = vsub.f32 1.0, %v753
          %v790 = vsub.f32 1.0, %v754
          %v791 = vsub.f32 1.0, %v755
          %v792 = vsub.f32 1.0, %v756
          %v793 = vadd.f32 %v789, %v762
          %v794 = vadd.f32 %v790, %v764
          %v795 = vadd.f32 %v791, %v766
          %v796 = vadd.f32 %v792, %v768
          %v797 = vmul.f32 %v704, %v793
          %v798 = vmul.f32 %v705, %v794
          %v799 = vmul.f32 %v706, %v795
          %v800 = vmul.f32 %v707, %v796
          %v801 = vadd.f32 %v785, %v797
          %v802 = vadd.f32 %v786, %v798
          %v803 = vadd.f32 %v787, %v799
          %v804 = vadd.f32 %v788, %v800
          %vm805 = vcmp.lt.f32.partialorder %v774, %v801
          %vm806 = vcmp.lt.f32.partialorder %v776, %v802
          %vm807 = vcmp.lt.f32.partialorder %v778, %v803
          %vm808 = vcmp.lt.f32.partialorder %v780, %v804
          %vm809 = vmand %vm769, %vm805
          %vm810 = vmand %vm770, %vm806
          %vm811 = vmand %vm771, %vm807
          %vm812 = vmand %vm772, %vm808
          %vm813 = vcmp.lt.f32.partialorder %v726, 0.5
          %vm814 = vcmp.lt.f32.partialorder %v727, 0.5
          %vm815 = vcmp.lt.f32.partialorder %v728, 0.5
          %vm816 = vcmp.lt.f32.partialorder %v729, 0.5
          %vm817 = vmand %vm809, %vm813
          %vm818 = vmand %vm810, %vm814
          %vm819 = vmand %vm811, %vm815
          %vm820 = vmand %vm812, %vm816
          %v821 = vmul.f32 %v704, %v753
          %v822 = vmul.f32 %v705, %v754
          %v823 = vmul.f32 %v706, %v755
          %v824 = vmul.f32 %v707, %v756
          %v825 = vsel %vm817, %v821, %v722
          %v826 = vsel %vm818, %v822, %v723
          %v827 = vsel %vm819, %v823, %v724
          %v828 = vsel %vm820, %v824, %v725
          %v829 = vsel %vm809, 1, 0
          %v830 = vsel %vm810, 1, 0
          %v831 = vsel %vm811, 1, 0
          %v832 = vsel %vm812, 1, 0
          %v833 = vcvt.s32.f32 %v829
          %v834 = vcvt.s32.f32 %v830
          %v835 = vcvt.s32.f32 %v831
          %v836 = vcvt.s32.f32 %v832
          %v837 = vmax.f32 %v726, %v833
          %v838 = vmax.f32 %v727, %v834
          %v839 = vmax.f32 %v728, %v835
          %v840 = vmax.f32 %v729, %v836
        $region53: #{tpu_custom_call.1} parent=39 // loop_footer
          %s721 = sadd.s32 1, %s717
        $region54: #{tpu_custom_call.1} parent=39 // loop_footer_branch
          %716 = sbr.rel target = $region50
        $region55: #{tpu_custom_call.1} parent=39 // loop_exit
          _
        %s841 = scalar_lea.vmem %s294, 64 [#allocation5]
        %v842 = vld [vmem:[%s841] sm:$0xff]
        %v843 = vld [vmem:[%s841 + $0x8] sm:$0xff]
        %v844 = vld [vmem:[%s841 + $0x50] sm:$0xff]
        %v845 = vld [vmem:[%s841 + $0x58] sm:$0xff]
        %v846 = vlog2.pop %v842
        %v847 = vmul.f32 %v846, 0.6931472
        %v848 = vlog2.pop %v843
        %v849 = vmul.f32 %v848, 0.6931472
        %v850 = vlog2.pop %v844
        %v851 = vmul.f32 %v850, 0.6931472
        %v852 = vlog2.pop %v845
        %v853 = vmul.f32 %v852, 0.6931472
        %v854 = vrcp.pop %v688
        %v855 = vmul.f32 %v847, %v854
        %v856 = vrcp.pop %v689
        %v857 = vmul.f32 %v849, %v856
        %v858 = vrcp.pop %v690
        %v859 = vmul.f32 %v851, %v858
        %v860 = vrcp.pop %v691
        %v861 = vmul.f32 %v853, %v860
        %v862 = vmul.f32 %v855, 1.442695
        %v863 = vpow.pop %v862
        %v864 = vmul.f32 %v857, 1.442695
        %v865 = vpow.pop %v864
        %v866 = vmul.f32 %v859, 1.442695
        %v867 = vpow.pop %v866
        %v868 = vmul.f32 %v861, 1.442695
        %v869 = vpow.pop %v868
        %v870 = vmul.f32 %v722, %v863
        %v871 = vmul.f32 %v723, %v865
        %v872 = vmul.f32 %v724, %v867
        %v873 = vmul.f32 %v725, %v869
        %v874 = vsel %vm692, %v870, %v722
        %v875 = vsel %vm693, %v871, %v723
        %v876 = vsel %vm694, %v872, %v724
        %v877 = vsel %vm695, %v873, %v725
        %v878 = vmax.f32 %v874, 1e-30
        %v879 = vmax.f32 %v875, 1e-30
        %v880 = vmax.f32 %v876, 1e-30
        %v881 = vmax.f32 %v877, 1e-30
        %v882 = vadd.f32 %v878, %v880
        %v883 = vadd.f32 %v879, %v881
        %v884 = vrcp.pop %v882
        %v885 = vmul.f32 %v878, %v884
        %v886 = vrcp.pop %v883
        %v887 = vmul.f32 %v879, %v886
        %vm888 = vcmask 130048
        %889 = vst.msk [vmem:[%s335] sm:$0xff] %vm888, %v885
        %890 = vst.msk [vmem:[%s335 + $0x8] sm:$0xff] %vm888, %v887
        %s891 = sand.u32 %s176, 1
        %s892 = scalar_lea.sflag [#allocation4], %s891
        %s893 = sand.u32 %s176, 1
        %s894 = smul.addr %s893, 16
        %s895 = scalar_lea.vmem [#allocation7], %s894
        // Predicated region
        $region56: #{tpu_custom_call.1} parent=39 // pred_check
          %p896 = pneg %p186
        $region57: #{tpu_custom_call.1} parent=39 // pred_check_branch
          %898 = sbr.rel (%p896) target = $region59
        $region58: #{tpu_custom_call.1} parent=39 // pred_region
          %s899 = smul.u32 2, %s30
          %s901 = ssub.s32 256, 256
          %902 = vsyncadd %s892, %s901
          %s903 = smul.addr %s29, 2
          %s904 = sadd.s32 %s899, %s903
          %s905 = smul.addr %s904, 128
          %s906 = scalar_lea.hbm %s5, %s905
          %s907 = sshll.u32 %s895, 4
          %s908 = int_to_ptr.vmem [resolvable:$true] %s907
          %913 = dma.vmem_to_hbm [thread:$0]  %s908, 256, %s906, %s892, 128, 128, 8
        $region59: #{tpu_custom_call.1} parent=39 // pred_fallthru
          _
      $region40: #{tpu_custom_call.1} parent=5 // pred_fallthru
        _
      %p914 = scmp.le.s32.totalorder 2, %s20
      // Predicated region
      $region60: #{tpu_custom_call.1} parent=5 // pred_check
        %p915 = pneg %p914
      $region61: #{tpu_custom_call.1} parent=5 // pred_check_branch
        %917 = sbr.rel (%p915) target = $region63
      $region62: #{tpu_custom_call.1} parent=5 // pred_region
        %s918 = ssub.s32 %s20, 2
        // Predicated region
        $region64: #{tpu_custom_call.1} parent=62 // pred_check
          %p919 = pneg %p192
        $region65: #{tpu_custom_call.1} parent=62 // pred_check_branch
          %921 = sbr.rel (%p919) target = $region67
        $region66: #{tpu_custom_call.1} parent=62 // pred_region
          %s922 = sand.u32 %s177, 1
          %s923 = scalar_lea.sflag [#allocation4], %s922
          %s924 = sand.u32 %s177, 1
          %s925 = smul.addr %s924, 16
          %s926 = scalar_lea.vmem [#allocation7], %s925
          %927 = dma.done %s923, 256
        $region67: #{tpu_custom_call.1} parent=62 // pred_fallthru
          _
      $region63: #{tpu_custom_call.1} parent=5 // pred_fallthru
        _
    $region6: #{tpu_custom_call.1} parent=1 // loop_footer
      %s24 = sadd.s32 1, %s20
    $region7: #{tpu_custom_call.1} parent=1 // loop_footer_branch
      %19 = sbr.rel target = $region3
    $region8: #{tpu_custom_call.1} parent=1 // loop_exit
      _
    %928 = vsyncpa [#allocation3], 1
    %s929 = scalar_lea.sflag [#allocation3], 1
    %930 = vsyncpa %s929, 1
    %931 = vsyncpa [#allocation6], 1
    %s932 = scalar_lea.sflag [#allocation6], 1
    %933 = vsyncpa %s932, 1
    %934 = vsyncpa [#allocation4], 1
    %s935 = scalar_lea.sflag [#allocation4], 1
    %936 = vsyncpa %s935, 1

</llo_original>
